<compile_context>
chip_gen: v7x
topology: tpu7x:2x2x1
jax: 0.10.0
libtpu: 0.0.40
codegen_flags: <defaults>
</compile_context>

<pallas_src>
import functools
import math

import jax
import jax.numpy as jnp
from jax import lax
from jax.experimental import pallas as pl
from jax.experimental.pallas import tpu as pltpu
import numpy as np

_LANES = 128
_SUBLANES = 8


def _round_up(x, m):
    return -(-x // m) * m


def _make_kernel(block_rows, chunk_rows, rows_true, ragged):
    """Kernel processing one (block_rows, 128) tile of each input per grid step."""
    n_chunks = block_rows // chunk_rows
    groups = chunk_rows // _SUBLANES

    def kernel(lg_ref, tg_ref, mk_ref, out_ref):
        def rsum(x):
            # (chunk_rows, 128) -> (8, 128): tile-aligned sublane-group sum,
            # pure VPU accumulation of whole vreg tiles (no XLU).
            return jnp.sum(x.reshape(groups, _SUBLANES, _LANES), axis=0)

        if ragged:
            # Hoisted loop invariants for the tail-row mask (only emitted when
            # the last grid block actually over-runs the array).
            valid_base = rows_true - pl.program_id(0) * block_rows
            row_iota = lax.broadcasted_iota(jnp.int32, (chunk_rows, _LANES), 0)

        def body(c, carry):
            acc_pt, acc_p, acc_t = carry
            r0 = pl.multiple_of(c * chunk_rows, chunk_rows)
            # Cast after load: inputs may be bf16 etc.; all math in f32.
            lg = lg_ref[pl.ds(r0, chunk_rows), :].astype(jnp.float32)
            tg = tg_ref[pl.ds(r0, chunk_rows), :].astype(jnp.float32)
            mk = mk_ref[pl.ds(r0, chunk_rows), :].astype(jnp.float32)

            # masked probability: sigmoid(logits) * mask (exp goes to EUP slot)
            p = mk / (1.0 + jnp.exp(-lg))
            t = tg * mk

            if ragged:
                valid = (row_iota + c * chunk_rows) < valid_base
                # select (not multiply): OOB garbage may be NaN/Inf.
                p = jnp.where(valid, p, 0.0)
                t = jnp.where(valid, t, 0.0)

            return (acc_pt + rsum(p * t), acc_p + rsum(p), acc_t + rsum(t))

        z = jnp.zeros((_SUBLANES, _LANES), jnp.float32)
        acc_pt, acc_p, acc_t = lax.fori_loop(0, n_chunks, body, (z, z, z))

        # Pack the three partial-sum tiles into one output block (single DMA).
        out_ref[:, 0:8, :] = acc_pt[None]
        out_ref[:, 8:16, :] = acc_p[None]
        out_ref[:, 16:24, :] = acc_t[None]

    return kernel


@functools.partial(
    jax.jit, static_argnames=("eps", "block_rows_max", "chunk_rows_max"))
def masked_dice_loss(logits, targets, maskmats, eps=1e-8,
                     block_rows_max=8192, chunk_rows_max=512):
    """logits / targets / maskmats: (b, c, z, y, x). Returns scalar 1 - dice."""
    assert logits.shape == targets.shape == maskmats.shape
    n = math.prod(logits.shape)

    itemsizes = [jnp.dtype(a.dtype).itemsize for a in (logits, targets, maskmats)]
    # Sublane granularity so any packed dtype (f32/bf16/int8) tiles cleanly.
    gran = max(_SUBLANES, 32 // min(itemsizes))

    def flat2d(x):
        x = x.reshape(-1)  # contiguous reshape: free bitcast
        if n % _LANES != 0:
            # Rare fallback (numel not 128-aligned). Zero padding is exact here
            # only because the padded mask entries are 0 (kills sigmoid(0)=0.5
            # and padded targets); this is the only path that copies.
            x = jnp.pad(x, (0, _LANES - n % _LANES))
        return x.reshape(-1, _LANES)  # (rows, 128), zero-copy when aligned

    lg2, tg2, mk2 = flat2d(logits), flat2d(targets), flat2d(maskmats)
    rows = lg2.shape[0]

    # Block sizing: as large as allowed (amortize per-step overhead), but no
    # larger than ~rows/2 so the parallel grid axis keeps >= 2 steps (v7x has
    # 2 TensorCores); everything stays a multiple of the sublane granularity.
    half = _round_up(-(-rows // 2), gran)
    block_rows = max(gran, min(block_rows_max, half))
    chunk_rows = min(_round_up(chunk_rows_max, gran), block_rows)
    block_rows = max(chunk_rows, (block_rows // chunk_rows) * chunk_rows)
    grid = -(-rows // block_rows)
    ragged = (rows % block_rows) != 0

    # 2 pipeline buffers x 3 inputs x one block, plus generous headroom for the
    # chunk temporaries / output buffers.
    dbuf_bytes = 2 * block_rows * _LANES * sum(itemsizes)
    vmem_limit = int(dbuf_bytes + (16 << 20))

    out = pl.pallas_call(
        _make_kernel(block_rows, chunk_rows, rows, ragged),
        out_shape=jax.ShapeDtypeStruct((grid, 3 * _SUBLANES, _LANES), jnp.float32),
        grid=(grid,),
        in_specs=[pl.BlockSpec((block_rows, _LANES), lambda g: (g, 0))] * 3,
        out_specs=pl.BlockSpec((1, 3 * _SUBLANES, _LANES), lambda g: (g, 0, 0)),
        compiler_params=pltpu.CompilerParams(
            dimension_semantics=("parallel",),
            vmem_limit_bytes=vmem_limit),
    )(lg2, tg2, mk2)

    # Tiny scalar epilogue (collapse partial tiles + dice combine).
    intersection = 2.0 * jnp.sum(out[:, 0:8, :])
    union = jnp.sum(out[:, 8:16, :]) + jnp.sum(out[:, 16:24, :])
    return 1.0 - (intersection + eps) / (union + eps)


def _reference_loss(logits, targets, maskmats, eps=1e-8):
    """Pure-JAX mirror of the PyTorch forward."""
    num = logits.shape[0]
    p = jax.nn.sigmoid(logits).reshape(num, -1)
    t = targets.reshape(num, -1)
    m = maskmats.reshape(num, -1)
    p = p * m
    t = t * m
    intersection = 2.0 * jnp.sum(p * t)
    union = jnp.sum(p) + jnp.sum(t)
    return 1.0 - (intersection + eps) / (union + eps)


if __name__ == "__main__":
    key = jax.random.PRNGKey(0)
    k1, k2, k3 = jax.random.split(key, 3)

    # Primary check: (b,c,z,y,x) volume, lane-aligned element count.
    B, C, Z, Y, X = 2, 4, 8, 16, 16
    logits = jax.random.normal(k1, (B, C, Z, Y, X), jnp.float32)
    targets = (jax.random.uniform(k2, (B, C, Z, Y, X)) > 0.7).astype(jnp.float32)
    # per-slice annotation mask, broadcast over channels and the spatial plane
    slice_mask = (jax.random.uniform(k3, (B, 1, Z, 1, 1)) > 0.3).astype(jnp.float32)
    maskmats = jnp.broadcast_to(slice_mask, (B, C, Z, Y, X))

    loss = jax.block_until_ready(masked_dice_loss(logits, targets, maskmats))
    ref = _reference_loss(logits, targets, maskmats)
    np.testing.assert_allclose(np.asarray(loss), np.asarray(ref),
                               rtol=1e-5, atol=1e-6)

    # Secondary check: exercises the ragged-last-block in-kernel masking path
    # (rows = 100, block = 56 -> last block over-runs and must be masked).
    shape2 = (2, 5, 10, 16, 8)
    l2 = jax.random.normal(k1, shape2, jnp.float32)
    t2 = (jax.random.uniform(k2, shape2) > 0.5).astype(jnp.float32)
    m2 = (jax.random.uniform(k3, shape2) > 0.25).astype(jnp.float32)
    loss2 = jax.block_until_ready(masked_dice_loss(l2, t2, m2))
    ref2 = _reference_loss(l2, t2, m2)
    np.testing.assert_allclose(np.asarray(loss2), np.asarray(ref2),
                               rtol=1e-5, atol=1e-6)

    print("KERNEL_OK")
</pallas_src>

<mosaic_0001>
module attributes {stable_mosaic.version = 11 : i64} {
  func.func @kernel(%arg0: i32, %arg1: memref<64x128xf32, #tpu.memory_space<vmem>>, %arg2: memref<64x128xf32, #tpu.memory_space<vmem>>, %arg3: memref<64x128xf32, #tpu.memory_space<vmem>>, %arg4: memref<1x24x128xf32, #tpu.memory_space<vmem>>) attributes {dimension_semantics = [#tpu.dimension_semantics<parallel>], iteration_bounds = array<i64: 2>, scalar_prefetch = 0 : i64, scratch_operands = 0 : i64, tpu.core_type = #tpu.core_type<tc>, window_params = [{transform_indices = @transform_0, window_bounds = array<i64: 64, 128>}, {transform_indices = @transform_1, window_bounds = array<i64: 64, 128>}, {transform_indices = @transform_2, window_bounds = array<i64: 64, 128>}, {transform_indices = @transform_3, window_bounds = array<i64: 1, 24, 128>}]} {
    %cst = arith.constant 0.000000e+00 : f32
    %0 = vector.broadcast %cst : f32 to vector<8x128xf32>
    %c0_i32 = arith.constant 0 : i32
    %c64_i32 = arith.constant 64 : i32
    %1 = arith.muli %c0_i32, %c64_i32 : i32
    %2 = tpu.assume_multiple %1, 64 : i32
    %3 = arith.index_cast %2 : i32 to index
    %c0 = arith.constant 0 : index
    %4 = vector.load %arg1[%3, %c0] : memref<64x128xf32, #tpu.memory_space<vmem>>, vector<64x128xf32>
    %5 = arith.index_cast %2 : i32 to index
    %c0_0 = arith.constant 0 : index
    %6 = vector.load %arg2[%5, %c0_0] : memref<64x128xf32, #tpu.memory_space<vmem>>, vector<64x128xf32>
    %7 = arith.index_cast %2 : i32 to index
    %c0_1 = arith.constant 0 : index
    %8 = vector.load %arg3[%7, %c0_1] : memref<64x128xf32, #tpu.memory_space<vmem>>, vector<64x128xf32>
    %cst_2 = arith.constant 0.000000e+00 : f32
    %9 = vector.broadcast %cst_2 : f32 to vector<64x128xf32>
    %10 = arith.subf %9, %4 : vector<64x128xf32>
    %11 = math.exp %10 : vector<64x128xf32>
    %cst_3 = arith.constant 1.000000e+00 : f32
    %12 = vector.broadcast %cst_3 : f32 to vector<64x128xf32>
    %13 = arith.addf %12, %11 : vector<64x128xf32>
    %14 = arith.divf %8, %13 : vector<64x128xf32>
    %15 = arith.mulf %6, %8 : vector<64x128xf32>
    %16 = arith.mulf %14, %15 : vector<64x128xf32>
    %17 = vector.shape_cast %16 : vector<64x128xf32> to vector<8x8x128xf32>
    %cst_4 = arith.constant dense<0.000000e+00> : vector<8x128xf32>
    %18 = vector.multi_reduction <add>, %17, %cst_4 [0] : vector<8x8x128xf32> to vector<8x128xf32>
    %19 = arith.addf %0, %18 : vector<8x128xf32>
    %20 = vector.shape_cast %14 : vector<64x128xf32> to vector<8x8x128xf32>
    %cst_5 = arith.constant dense<0.000000e+00> : vector<8x128xf32>
    %21 = vector.multi_reduction <add>, %20, %cst_5 [0] : vector<8x8x128xf32> to vector<8x128xf32>
    %22 = arith.addf %0, %21 : vector<8x128xf32>
    %23 = vector.shape_cast %15 : vector<64x128xf32> to vector<8x8x128xf32>
    %cst_6 = arith.constant dense<0.000000e+00> : vector<8x128xf32>
    %24 = vector.multi_reduction <add>, %23, %cst_6 [0] : vector<8x8x128xf32> to vector<8x128xf32>
    %25 = arith.addf %0, %24 : vector<8x128xf32>
    %c1_i32 = arith.constant 1 : i32
    %26 = vector.shape_cast %19 : vector<8x128xf32> to vector<1x8x128xf32>
    %c0_7 = arith.constant 0 : index
    %c0_8 = arith.constant 0 : index
    %c0_9 = arith.constant 0 : index
    %27 = vector.load %arg4[%c0_7, %c0_8, %c0_9] : memref<1x24x128xf32, #tpu.memory_space<vmem>>, vector<1x8x128xf32>
    tpu.vector_store %arg4[%c0_7, %c0_8, %c0_9], %26 {strides = array<i32>} : memref<1x24x128xf32, #tpu.memory_space<vmem>>, vector<1x8x128xf32>,
    %28 = vector.shape_cast %22 : vector<8x128xf32> to vector<1x8x128xf32>
    %c0_10 = arith.constant 0 : index
    %c8 = arith.constant 8 : index
    %c0_11 = arith.constant 0 : index
    %29 = vector.load %arg4[%c0_10, %c8, %c0_11] : memref<1x24x128xf32, #tpu.memory_space<vmem>>, vector<1x8x128xf32>
    tpu.vector_store %arg4[%c0_10, %c8, %c0_11], %28 {strides = array<i32>} : memref<1x24x128xf32, #tpu.memory_space<vmem>>, vector<1x8x128xf32>,
    %30 = vector.shape_cast %25 : vector<8x128xf32> to vector<1x8x128xf32>
    %c0_12 = arith.constant 0 : index
    %c16 = arith.constant 16 : index
    %c0_13 = arith.constant 0 : index
    %31 = vector.load %arg4[%c0_12, %c16, %c0_13] : memref<1x24x128xf32, #tpu.memory_space<vmem>>, vector<1x8x128xf32>
    tpu.vector_store %arg4[%c0_12, %c16, %c0_13], %30 {strides = array<i32>} : memref<1x24x128xf32, #tpu.memory_space<vmem>>, vector<1x8x128xf32>,
    return
  }
  func.func @transform_0(%arg0: i32) -> (i32, i32) {
    %c0_i32 = arith.constant 0 : i32
    %c0_i32_0 = arith.constant 0 : i32
    return %arg0, %c0_i32 : i32, i32
  }
  func.func @transform_1(%arg0: i32) -> (i32, i32) {
    %c0_i32 = arith.constant 0 : i32
    %c0_i32_0 = arith.constant 0 : i32
    return %arg0, %c0_i32 : i32, i32
  }
  func.func @transform_2(%arg0: i32) -> (i32, i32) {
    %c0_i32 = arith.constant 0 : i32
    %c0_i32_0 = arith.constant 0 : i32
    return %arg0, %c0_i32 : i32, i32
  }
  func.func @transform_3(%arg0: i32) -> (i32, i32, i32) {
    %c0_i32 = arith.constant 0 : i32
    %c0_i32_0 = arith.constant 0 : i32
    %c0_i32_1 = arith.constant 0 : i32
    return %arg0, %c0_i32, %c0_i32_0 : i32, i32, i32
  }
}

</mosaic_0001>

<llo_original>
// kernel: masked_dice_loss.1
$region0: #{masked_dice_loss.1}
  #allocation0 [shape = 'u32[]', space=smem, size = 0x4, offset = 0x4, fixed_abs, tag = 'smem constant byte address 0x4 - core index']
  #allocation1 [shape = 'u32[144,128]{1,0:T(1,128)}', space=vmem, size = 0x12000, scoped, tag = 'internal scratch']
  %s0 = inlined_call_operand.vmem [shape: f32[128,128], index: 0, kind: input, shape index: {}]
  %s1 = inlined_call_operand.vmem [shape: f32[128,128], index: 1, kind: input, shape index: {}]
  %s2 = inlined_call_operand.vmem [shape: f32[128,128], index: 2, kind: input, shape index: {}]
  %s3 = inlined_call_operand.vmem [shape: f32[2,24,128], index: 3, kind: output, shape index: {}]
  %s4 = sld [smem:[#allocation0]]
  $region45: #{masked_dice_loss.1} parent=0
    _
  %s6 = ssub.s32 1, %s4
  %s7 = scalar_select 0, %s6, %s4
  loop: start=0, step=1, limit=4
  $region2: #{masked_dice_loss.1} parent=0 // loop_pre_header
    _
  $region3: #{masked_dice_loss.1} parent=0 // loop_header
    %s9 = sphi 0, %s13
    %p10 = scmp.ge.s32.totalorder %s9, 4
    %s19 = sphi 0, %s21
    %s22 = sphi 0, %s19
    %s23 = sphi 0, %s22
    %s39 = sphi 0, %s23
    %s45 = sphi 0, %s47
    %s48 = sphi 0, %s45
    %s49 = sphi 0, %s48
    %s65 = sphi 0, %s49
    %s71 = sphi 0, %s73
    %s74 = sphi 0, %s71
    %s75 = sphi 0, %s74
    %s91 = sphi 0, %s75
    %s97 = sphi 0, %s99
    %s100 = sphi 0, %s97
    %s101 = sphi 0, %s100
    %s117 = sphi 0, %s101
  $region4: #{masked_dice_loss.1} parent=0 // loop_header_branch
    %12 = sbr.rel (%p10) target = $region8
  $region5: #{masked_dice_loss.1} parent=0 // loop_body
    %s14 = ssub.s32 %s9, 1
    %s15 = ssub.s32 %s9, 2
    %s16 = sadd.s32 %s9, 1
    %s17 = ssub.s32 %s9, %s16
    %p18 = scmp.eq.s32.totalorder %s17, 0
    %s20 = sadd.s32 %s19, 1
    %s21 = scalar_select %p18, %s19, %s20
    %p24 = pneg %p18
    %p25 = scmp.eq.s32.totalorder %s9, 1
    %p26 = por %p24, %p25
    %p27 = scmp.ne.s32.totalorder %s19, %s22
    %p28 = scmp.eq.s32.totalorder %s9, 0
    %p29 = por %p27, %p28
    %p30 = scmp.ne.s32.totalorder %s19, %s22
    %p31 = scmp.eq.s32.totalorder %s14, 1
    %p32 = por %p30, %p31
    %p33 = scmp.ne.s32.totalorder %s22, %s23
    %p34 = scmp.eq.s32.totalorder %s14, 0
    %p35 = por %p33, %p34
    %p36 = scmp.ne.s32.totalorder %s22, %s23
    %p37 = scmp.eq.s32.totalorder %s15, 1
    %p38 = por %p36, %p37
    %p40 = scmp.ne.s32.totalorder %s23, %s39
    %p41 = scmp.eq.s32.totalorder %s15, 0
    %p42 = por %p40, %p41
    %s43 = ssub.s32 %s9, %s16
    %p44 = scmp.eq.s32.totalorder %s43, 0
    %s46 = sadd.s32 %s45, 1
    %s47 = scalar_select %p44, %s45, %s46
    %p50 = pneg %p44
    %p51 = scmp.eq.s32.totalorder %s9, 1
    %p52 = por %p50, %p51
    %p53 = scmp.ne.s32.totalorder %s45, %s48
    %p54 = scmp.eq.s32.totalorder %s9, 0
    %p55 = por %p53, %p54
    %p56 = scmp.ne.s32.totalorder %s45, %s48
    %p57 = scmp.eq.s32.totalorder %s14, 1
    %p58 = por %p56, %p57
    %p59 = scmp.ne.s32.totalorder %s48, %s49
    %p60 = scmp.eq.s32.totalorder %s14, 0
    %p61 = por %p59, %p60
    %p62 = scmp.ne.s32.totalorder %s48, %s49
    %p63 = scmp.eq.s32.totalorder %s15, 1
    %p64 = por %p62, %p63
    %p66 = scmp.ne.s32.totalorder %s49, %s65
    %p67 = scmp.eq.s32.totalorder %s15, 0
    %p68 = por %p66, %p67
    %s69 = ssub.s32 %s9, %s16
    %p70 = scmp.eq.s32.totalorder %s69, 0
    %s72 = sadd.s32 %s71, 1
    %s73 = scalar_select %p70, %s71, %s72
    %p76 = pneg %p70
    %p77 = scmp.eq.s32.totalorder %s9, 1
    %p78 = por %p76, %p77
    %p79 = scmp.ne.s32.totalorder %s71, %s74
    %p80 = scmp.eq.s32.totalorder %s9, 0
    %p81 = por %p79, %p80
    %p82 = scmp.ne.s32.totalorder %s71, %s74
    %p83 = scmp.eq.s32.totalorder %s14, 1
    %p84 = por %p82, %p83
    %p85 = scmp.ne.s32.totalorder %s74, %s75
    %p86 = scmp.eq.s32.totalorder %s14, 0
    %p87 = por %p85, %p86
    %p88 = scmp.ne.s32.totalorder %s74, %s75
    %p89 = scmp.eq.s32.totalorder %s15, 1
    %p90 = por %p88, %p89
    %p92 = scmp.ne.s32.totalorder %s75, %s91
    %p93 = scmp.eq.s32.totalorder %s15, 0
    %p94 = por %p92, %p93
    %s95 = ssub.s32 %s9, %s16
    %p96 = scmp.eq.s32.totalorder %s95, 0
    %s98 = sadd.s32 %s97, 1
    %s99 = scalar_select %p96, %s97, %s98
    %p102 = pneg %p96
    %p103 = scmp.eq.s32.totalorder %s9, 1
    %p104 = por %p102, %p103
    %p105 = scmp.ne.s32.totalorder %s97, %s100
    %p106 = scmp.eq.s32.totalorder %s9, 0
    %p107 = por %p105, %p106
    %p108 = scmp.ne.s32.totalorder %s97, %s100
    %p109 = scmp.eq.s32.totalorder %s14, 1
    %p110 = por %p108, %p109
    %p111 = scmp.ne.s32.totalorder %s100, %s101
    %p112 = scmp.eq.s32.totalorder %s14, 0
    %p113 = por %p111, %p112
    %p114 = scmp.ne.s32.totalorder %s100, %s101
    %p115 = scmp.eq.s32.totalorder %s15, 1
    %p116 = por %p114, %p115
    %p118 = scmp.ne.s32.totalorder %s101, %s117
    %p119 = scmp.eq.s32.totalorder %s15, 0
    %p120 = por %p118, %p119
    %p121 = scmp.le.s32.totalorder 1, %s9
    %p122 = scmp.lt.s32.totalorder %s9, 3
    %p123 = pnand %p121, %p122
    %p124 = pneg %p123
    // Predicated region
    $region9: #{masked_dice_loss.1} parent=5 // pred_check
      _
    $region10: #{masked_dice_loss.1} parent=5 // pred_check_branch
      %126 = sbr.rel (%p123) target = $region12
    $region11: #{masked_dice_loss.1} parent=5 // pred_region
      %s127 = ssub.s32 %s9, 1
    $region12: #{masked_dice_loss.1} parent=5 // pred_fallthru
      _
    %p128 = scmp.lt.s32.totalorder %s9, 2
    // Predicated region
    $region13: #{masked_dice_loss.1} parent=5 // pred_check
      %p129 = pneg %p128
    $region14: #{masked_dice_loss.1} parent=5 // pred_check_branch
      %131 = sbr.rel (%p129) target = $region16
    $region15: #{masked_dice_loss.1} parent=5 // pred_region
      // Predicated region
      $region17: #{masked_dice_loss.1} parent=15 // pred_check
        %p132 = pneg %p29
      $region18: #{masked_dice_loss.1} parent=15 // pred_check_branch
        %134 = sbr.rel (%p132) target = $region20
      $region19: #{masked_dice_loss.1} parent=15 // pred_region
        %s135 = smul.u32 8, %s9
        %p136 = scmp.lt.s32.totalorder %s135, 15
        %s137 = scalar_select %p136, %s135, 15
        %s138 = smul.addr %s137, 8
        %s139 = scalar_lea.vmem %s0, %s138
        %s140 = smul.u32 8, %s9
      $region20: #{masked_dice_loss.1} parent=15 // pred_fallthru
        _
      // Predicated region
      $region21: #{masked_dice_loss.1} parent=15 // pred_check
        %p141 = pneg %p55
      $region22: #{masked_dice_loss.1} parent=15 // pred_check_branch
        %143 = sbr.rel (%p141) target = $region24
      $region23: #{masked_dice_loss.1} parent=15 // pred_region
        %s144 = smul.u32 8, %s9
        %p145 = scmp.lt.s32.totalorder %s144, 15
        %s146 = scalar_select %p145, %s144, 15
        %s147 = smul.addr %s146, 8
        %s148 = scalar_lea.vmem %s1, %s147
        %s149 = smul.u32 8, %s9
      $region24: #{masked_dice_loss.1} parent=15 // pred_fallthru
        _
      // Predicated region
      $region25: #{masked_dice_loss.1} parent=15 // pred_check
        %p150 = pneg %p81
      $region26: #{masked_dice_loss.1} parent=15 // pred_check_branch
        %152 = sbr.rel (%p150) target = $region28
      $region27: #{masked_dice_loss.1} parent=15 // pred_region
        %s153 = smul.u32 8, %s9
        %p154 = scmp.lt.s32.totalorder %s153, 15
        %s155 = scalar_select %p154, %s153, 15
        %s156 = smul.addr %s155, 8
        %s157 = scalar_lea.vmem %s2, %s156
        %s158 = smul.u32 8, %s9
      $region28: #{masked_dice_loss.1} parent=15 // pred_fallthru
        _
    $region16: #{masked_dice_loss.1} parent=5 // pred_fallthru
      _
    %p159 = scmp.le.s32.totalorder 1, %s9
    %p160 = scmp.lt.s32.totalorder %s9, 3
    %p161 = pnand %p159, %p160
    %p162 = pneg %p161
    // Predicated region
    $region29: #{masked_dice_loss.1} parent=5 // pred_check
      _
    $region30: #{masked_dice_loss.1} parent=5 // pred_check_branch
      %164 = sbr.rel (%p161) target = $region32
    $region31: #{masked_dice_loss.1} parent=5 // pred_region
      %s165 = ssub.s32 %s9, 1
      %s166 = smul.u32 8, %s14
      %p167 = scmp.lt.s32.totalorder %s166, 15
      %s168 = scalar_select %p167, %s166, 15
      %s169 = smul.addr %s168, 8
      %s170 = scalar_lea.vmem %s0, %s169
      %p171 = pneg %p35
      %p172 = pneg %p32
      %s173 = smul.u32 8, %s14
      %p174 = scmp.lt.s32.totalorder %s173, 15
      %s175 = scalar_select %p174, %s173, 15
      %s176 = smul.addr %s175, 8
      %s177 = scalar_lea.vmem %s1, %s176
      %p178 = pneg %p61
      %p179 = pneg %p58
      %s180 = smul.u32 8, %s14
      %p181 = scmp.lt.s32.totalorder %s180, 15
      %s182 = scalar_select %p181, %s180, 15
      %s183 = smul.addr %s182, 8
      %s184 = scalar_lea.vmem %s2, %s183
      %p185 = pneg %p87
      %p186 = pneg %p84
      %p187 = pneg %p113
      %p188 = pneg %p110
      %p189 = scmp.lt.s32.totalorder %s14, 1
      %s190 = scalar_select %p189, %s14, 1
      %s191 = smul.addr %s190, 3
      %s192 = smul.addr %s191, 8
      %s193 = scalar_lea.vmem %s3, %s192
      %s194 = smul.u32 8, %s14
      %p195 = scmp.lt.s32.totalorder %s194, 15
      %s196 = scalar_select %p195, %s194, 15
      %s197 = smul.addr %s196, 8
      %s198 = scalar_lea.vmem %s0, %s197
      %s199 = smul.u32 8, %s14
      %s200 = smul.u32 8, %s14
      %p201 = scmp.lt.s32.totalorder %s200, 15
      %s202 = scalar_select %p201, %s200, 15
      %s203 = smul.addr %s202, 8
      %s204 = scalar_lea.vmem %s1, %s203
      %s205 = smul.u32 8, %s14
      %s206 = smul.u32 8, %s14
      %p207 = scmp.lt.s32.totalorder %s206, 15
      %s208 = scalar_select %p207, %s206, 15
      %s209 = smul.addr %s208, 8
      %s210 = scalar_lea.vmem %s2, %s209
      %s211 = smul.u32 8, %s14
      %p212 = scmp.lt.s32.totalorder %s14, 1
      %s213 = scalar_select %p212, %s14, 1
      %s214 = smul.addr %s213, 3
      %s215 = smul.addr %s214, 8
      %s216 = scalar_lea.vmem %s3, %s215
      %v217 = vld [vmem:[%s198] sm:$0xff]
      %v218 = vld [vmem:[%s198 + $0x8] sm:$0xff]
      %v219 = vld [vmem:[%s198 + $0x10] sm:$0xff]
      %v220 = vld [vmem:[%s198 + $0x18] sm:$0xff]
      %v221 = vld [vmem:[%s198 + $0x20] sm:$0xff]
      %v222 = vld [vmem:[%s198 + $0x28] sm:$0xff]
      %v223 = vld [vmem:[%s198 + $0x30] sm:$0xff]
      %v224 = vld [vmem:[%s198 + $0x38] sm:$0xff]
      %v225 = vld [vmem:[%s204] sm:$0xff]
      %v226 = vld [vmem:[%s204 + $0x8] sm:$0xff]
      %v227 = vld [vmem:[%s204 + $0x10] sm:$0xff]
      %v228 = vld [vmem:[%s204 + $0x18] sm:$0xff]
      %v229 = vld [vmem:[%s204 + $0x20] sm:$0xff]
      %v230 = vld [vmem:[%s204 + $0x28] sm:$0xff]
      %v231 = vld [vmem:[%s204 + $0x30] sm:$0xff]
      %v232 = vld [vmem:[%s204 + $0x38] sm:$0xff]
      %v233 = vld [vmem:[%s210] sm:$0xff]
      %v234 = vld [vmem:[%s210 + $0x8] sm:$0xff]
      %v235 = vld [vmem:[%s210 + $0x10] sm:$0xff]
      %v236 = vld [vmem:[%s210 + $0x18] sm:$0xff]
      %v237 = vld [vmem:[%s210 + $0x20] sm:$0xff]
      %v238 = vld [vmem:[%s210 + $0x28] sm:$0xff]
      %v239 = vld [vmem:[%s210 + $0x30] sm:$0xff]
      %v240 = vld [vmem:[%s210 + $0x38] sm:$0xff]
      %v241 = vsub.f32 0.0, %v217
      %v242 = vsub.f32 0.0, %v218
      %v243 = vsub.f32 0.0, %v219
      %v244 = vsub.f32 0.0, %v220
      %v245 = vsub.f32 0.0, %v221
      %v246 = vsub.f32 0.0, %v222
      %v247 = vsub.f32 0.0, %v223
      %v248 = vsub.f32 0.0, %v224
      %v249 = vmul.f32 %v241, 1.442695
      %v250 = vpow.pop %v249
      %v251 = vmul.f32 %v242, 1.442695
      %v252 = vpow.pop %v251
      %v253 = vmul.f32 %v243, 1.442695
      %v254 = vpow.pop %v253
      %v255 = vmul.f32 %v244, 1.442695
      %v256 = vpow.pop %v255
      %v257 = vmul.f32 %v245, 1.442695
      %v258 = vpow.pop %v257
      %v259 = vmul.f32 %v246, 1.442695
      %v260 = vpow.pop %v259
      %v261 = vmul.f32 %v247, 1.442695
      %v262 = vpow.pop %v261
      %v263 = vmul.f32 %v248, 1.442695
      %v264 = vpow.pop %v263
      %v265 = vadd.f32 %v250, 1.0
      %v266 = vadd.f32 %v252, 1.0
      %v267 = vadd.f32 %v254, 1.0
      %v268 = vadd.f32 %v256, 1.0
      %v269 = vadd.f32 %v258, 1.0
      %v270 = vadd.f32 %v260, 1.0
      %v271 = vadd.f32 %v262, 1.0
      %v272 = vadd.f32 %v264, 1.0
      %v273 = vrcp.pop %v265
      %v274 = vmul.f32 %v233, %v273
      %v275 = vrcp.pop %v266
      %v276 = vmul.f32 %v234, %v275
      %v277 = vrcp.pop %v267
      %v278 = vmul.f32 %v235, %v277
      %v279 = vrcp.pop %v268
      %v280 = vmul.f32 %v236, %v279
      %v281 = vrcp.pop %v269
      %v282 = vmul.f32 %v237, %v281
      %v283 = vrcp.pop %v270
      %v284 = vmul.f32 %v238, %v283
      %v285 = vrcp.pop %v271
      %v286 = vmul.f32 %v239, %v285
      %v287 = vrcp.pop %v272
      %v288 = vmul.f32 %v240, %v287
      %v289 = vmul.f32 %v225, %v233
      %v290 = vmul.f32 %v226, %v234
      %v291 = vmul.f32 %v227, %v235
      %v292 = vmul.f32 %v228, %v236
      %v293 = vmul.f32 %v229, %v237
      %v294 = vmul.f32 %v230, %v238
      %v295 = vmul.f32 %v231, %v239
      %v296 = vmul.f32 %v232, %v240
      %v297 = vmul.f32 %v274, %v289
      %v298 = vmul.f32 %v276, %v290
      %v299 = vmul.f32 %v278, %v291
      %v300 = vmul.f32 %v280, %v292
      %v301 = vmul.f32 %v282, %v293
      %v302 = vmul.f32 %v284, %v294
      %v303 = vmul.f32 %v286, %v295
      %v304 = vmul.f32 %v288, %v296
      %v305 = vadd.f32 %v297, %v298
      %v306 = vadd.f32 %v305, %v299
      %v307 = vadd.f32 %v306, %v300
      %v308 = vadd.f32 %v307, %v301
      %v309 = vadd.f32 %v308, %v302
      %v310 = vadd.f32 %v309, %v303
      %v311 = vadd.f32 %v310, %v304
      %v312 = vadd.f32 %v311, 0.0
      %v313 = vadd.f32 %v274, %v276
      %v314 = vadd.f32 %v313, %v278
      %v315 = vadd.f32 %v314, %v280
      %v316 = vadd.f32 %v315, %v282
      %v317 = vadd.f32 %v316, %v284
      %v318 = vadd.f32 %v317, %v286
      %v319 = vadd.f32 %v318, %v288
      %v320 = vadd.f32 %v319, 0.0
      %v321 = vadd.f32 %v289, %v290
      %v322 = vadd.f32 %v321, %v291
      %v323 = vadd.f32 %v322, %v292
      %v324 = vadd.f32 %v323, %v293
      %v325 = vadd.f32 %v324, %v294
      %v326 = vadd.f32 %v325, %v295
      %v327 = vadd.f32 %v326, %v296
      %v328 = vadd.f32 %v327, 0.0
      %329 = vst [vmem:[%s216] sm:$0xff] %v312
      %330 = vst [vmem:[%s216 + $0x8] sm:$0xff] %v320
      %331 = vst [vmem:[%s216 + $0x10] sm:$0xff] %v328
      %p332 = scmp.lt.s32.totalorder %s14, 1
      %s333 = scalar_select %p332, %s14, 1
      %s334 = smul.addr %s333, 3
      %s335 = smul.addr %s334, 8
      %s336 = scalar_lea.vmem %s3, %s335
      // Predicated region
      $region33: #{masked_dice_loss.1} parent=31 // pred_check
        %p337 = pneg %p110
      $region34: #{masked_dice_loss.1} parent=31 // pred_check_branch
        %339 = sbr.rel (%p337) target = $region36
      $region35: #{masked_dice_loss.1} parent=31 // pred_region
        _
      $region36: #{masked_dice_loss.1} parent=31 // pred_fallthru
        _
    $region32: #{masked_dice_loss.1} parent=5 // pred_fallthru
      _
    %p340 = scmp.le.s32.totalorder 2, %s9
    // Predicated region
    $region37: #{masked_dice_loss.1} parent=5 // pred_check
      %p341 = pneg %p340
    $region38: #{masked_dice_loss.1} parent=5 // pred_check_branch
      %343 = sbr.rel (%p341) target = $region40
    $region39: #{masked_dice_loss.1} parent=5 // pred_region
      %s344 = ssub.s32 %s9, 2
      // Predicated region
      $region41: #{masked_dice_loss.1} parent=39 // pred_check
        %p345 = pneg %p116
      $region42: #{masked_dice_loss.1} parent=39 // pred_check_branch
        %347 = sbr.rel (%p345) target = $region44
      $region43: #{masked_dice_loss.1} parent=39 // pred_region
        %p348 = scmp.lt.s32.totalorder %s15, 1
        %s349 = scalar_select %p348, %s15, 1
        %s350 = smul.addr %s349, 3
        %s351 = smul.addr %s350, 8
        %s352 = scalar_lea.vmem %s3, %s351
      $region44: #{masked_dice_loss.1} parent=39 // pred_fallthru
        _
    $region40: #{masked_dice_loss.1} parent=5 // pred_fallthru
      _
  $region6: #{masked_dice_loss.1} parent=0 // loop_footer
    %s13 = sadd.s32 1, %s9
  $region7: #{masked_dice_loss.1} parent=0 // loop_footer_branch
    %8 = sbr.rel target = $region3
  $region8: #{masked_dice_loss.1} parent=0 // loop_exit
    _

</llo_original>
